<compile_context>
chip_gen: v6e
topology: v6e:2x2x1
jax: 0.10.0
libtpu: 0.0.40
codegen_flags: <defaults>
</compile_context>

<pallas_src>
from math import sqrt
from functools import partial

import jax
import jax.numpy as jnp
from jax.experimental import pallas as pl
from jax.experimental.pallas import tpu as pltpu


def _round_up(x, m):
    return ((x + m - 1) // m) * m


def _prenorm_ffn_kernel(x_ref, g_ref, bln_ref, w1_ref, b1_ref, w2_ref, b2_ref, o_ref,
                        *, dim, eps):
    # x_ref: (tm, dim_pad); gamma/beta: (1, dim_pad) f32; w1: (dim_pad, hidden_pad);
    # b1: (1, hidden_pad) f32; w2: (hidden_pad, dim_pad); b2: (1, dim_pad) f32.
    x = x_ref[...].astype(jnp.float32)

    # LayerNorm over the true `dim` features. Padded columns are zero, so sums are exact;
    # gamma/beta are zero-padded, so normalized padded columns stay exactly zero.
    inv_dim = jnp.float32(1.0 / dim)
    mean = jnp.sum(x, axis=-1, keepdims=True) * inv_dim
    var = jnp.sum(x * x, axis=-1, keepdims=True) * inv_dim - mean * mean
    inv_std = jax.lax.rsqrt(var + jnp.float32(eps))
    xn = (x - mean) * inv_std
    xn = xn * g_ref[...] + bln_ref[...]

    # First linear on the MXU in the weight dtype (bf16 stays bf16), f32 accumulation.
    h = jnp.dot(xn.astype(w1_ref.dtype), w1_ref[...],
                preferred_element_type=jnp.float32) + b1_ref[...]

    # Exact (erf-based) GELU, matching torch.nn.GELU() default. (erf runs on the EUP.)
    h = 0.5 * h * (1.0 + jax.lax.erf(h * jnp.float32(1.0 / sqrt(2.0))))

    # Second linear + bias.
    o = jnp.dot(h.astype(w2_ref.dtype), w2_ref[...],
                preferred_element_type=jnp.float32) + b2_ref[...]

    o_ref[...] = o.astype(o_ref.dtype)


@partial(jax.jit, static_argnames=("tm", "eps"))
def pre_norm_feed_forward(x, gamma, beta, w1, b1, w2, b2, *, tm=256, eps=1e-5):
    """PreNorm(dim, FeedForward): x (B, N, dim) -> (B, N, dim)."""
    B, N, dim = x.shape
    hidden = w1.shape[1]
    M = B * N

    # Lane-dense padding of feature dims (multiples of 128); row padding to the tile size.
    dim_pad = _round_up(dim, 128)
    hidden_pad = _round_up(hidden, 128)
    tm_eff = min(tm, _round_up(M, 8))           # keep sublane dim a multiple of 8
    M_pad = _round_up(M, tm_eff)

    x2 = jnp.pad(x.reshape(M, dim), ((0, M_pad - M), (0, dim_pad - dim)))
    # LN affine + biases: cast to f32 once here (no per-grid-step casts in the kernel),
    # zero-pad so padded feature columns contribute exactly zero downstream.
    g2 = jnp.pad(gamma.astype(jnp.float32).reshape(1, dim), ((0, 0), (0, dim_pad - dim)))
    bl2 = jnp.pad(beta.astype(jnp.float32).reshape(1, dim), ((0, 0), (0, dim_pad - dim)))
    w1p = jnp.pad(w1, ((0, dim_pad - dim), (0, hidden_pad - hidden)))
    b1p = jnp.pad(b1.astype(jnp.float32).reshape(1, hidden), ((0, 0), (0, hidden_pad - hidden)))
    w2p = jnp.pad(w2, ((0, hidden_pad - hidden), (0, dim_pad - dim)))
    b2p = jnp.pad(b2.astype(jnp.float32).reshape(1, dim), ((0, 0), (0, dim_pad - dim)))

    grid = (M_pad // tm_eff,)

    bytes_per = jnp.dtype(x.dtype).itemsize
    cost = pl.CostEstimate(
        flops=2 * M * dim * hidden * 2 + 8 * M * dim,           # two matmuls + LN
        transcendentals=M * hidden,                             # erf
        bytes_accessed=(M * dim * 2 * bytes_per                 # x in + out
                        + (dim * hidden * 2) * jnp.dtype(w1.dtype).itemsize
                        + (hidden + 3 * dim) * 4),
    )

    kernel = partial(_prenorm_ffn_kernel, dim=dim, eps=eps)

    out = pl.pallas_call(
        kernel,
        out_shape=jax.ShapeDtypeStruct((M_pad, dim_pad), x.dtype),
        grid_spec=pltpu.PrefetchScalarGridSpec(
            num_scalar_prefetch=0,
            grid=grid,
            in_specs=[
                pl.BlockSpec((tm_eff, dim_pad), lambda i: (i, 0)),       # x row tile
                pl.BlockSpec((1, dim_pad), lambda i: (0, 0)),            # LN gamma (f32)
                pl.BlockSpec((1, dim_pad), lambda i: (0, 0)),            # LN beta  (f32)
                pl.BlockSpec((dim_pad, hidden_pad), lambda i: (0, 0)),   # W1 (resident)
                pl.BlockSpec((1, hidden_pad), lambda i: (0, 0)),         # b1 (f32)
                pl.BlockSpec((hidden_pad, dim_pad), lambda i: (0, 0)),   # W2 (resident)
                pl.BlockSpec((1, dim_pad), lambda i: (0, 0)),            # b2 (f32)
            ],
            out_specs=pl.BlockSpec((tm_eff, dim_pad), lambda i: (i, 0)),
        ),
        compiler_params=pltpu.CompilerParams(
            dimension_semantics=("parallel",),
            vmem_limit_bytes=64 * 1024 * 1024,
        ),
        cost_estimate=cost,
    )(x2, g2, bl2, w1p, b1p, w2p, b2p)

    # TODO(synk): for very large dim/hidden on v7x (64 MiB VMEM/TC), tile the hidden
    # dimension with an "arbitrary" trailing grid axis instead of keeping W1/W2 resident.

    return out[:M, :dim].reshape(B, N, dim)


def _reference(x, gamma, beta, w1, b1, w2, b2, eps=1e-5):
    xf = x.astype(jnp.float32)
    mean = jnp.mean(xf, axis=-1, keepdims=True)
    var = jnp.mean((xf - mean) ** 2, axis=-1, keepdims=True)
    xn = (xf - mean) / jnp.sqrt(var + eps) * gamma + beta
    h = jnp.einsum("bnd,dh->bnh", xn, w1) + b1
    h = 0.5 * h * (1.0 + jax.lax.erf(h / jnp.sqrt(2.0)))
    return (jnp.einsum("bnh,hd->bnd", h, w2) + b2).astype(x.dtype)


if __name__ == "__main__":
    # Small shapes consistent with the module usage: batch=2, seq=8, dim=32, hidden=64.
    B, N, dim, hidden = 2, 8, 32, 64

    key = jax.random.PRNGKey(0)
    kx, kg, kb, k1, k2, k3, k4 = jax.random.split(key, 7)

    x = jax.random.normal(kx, (B, N, dim), dtype=jnp.float32)

    # LayerNorm affine params (PyTorch default init is gamma=1, beta=0; use random-ish
    # but deterministic values to actually exercise the affine path).
    gamma = 1.0 + 0.1 * jax.random.normal(kg, (dim,), dtype=jnp.float32)
    beta = 0.1 * jax.random.normal(kb, (dim,), dtype=jnp.float32)

    # FeedForward params, stored (in, out) like x @ W + b (transpose of nn.Linear.weight).
    bound1 = 1.0 / sqrt(dim)
    w1 = jax.random.uniform(k1, (dim, hidden), minval=-bound1, maxval=bound1, dtype=jnp.float32)
    b1 = jax.random.uniform(k2, (hidden,), minval=-bound1, maxval=bound1, dtype=jnp.float32)
    bound2 = 1.0 / sqrt(hidden)
    w2 = jax.random.uniform(k3, (hidden, dim), minval=-bound2, maxval=bound2, dtype=jnp.float32)
    b2 = jax.random.uniform(k4, (dim,), minval=-bound2, maxval=bound2, dtype=jnp.float32)

    out = pre_norm_feed_forward(x, gamma, beta, w1, b1, w2, b2)
    out = jax.block_until_ready(out)

    ref = _reference(x, gamma, beta, w1, b1, w2, b2)
    assert out.shape == (B, N, dim)
    assert jnp.allclose(out, ref, atol=1e-4, rtol=1e-4), "mismatch vs reference"

    print("KERNEL_OK")
</pallas_src>

<mosaic_0001>
module attributes {stable_mosaic.version = 11 : i64} {
  func.func @_prenorm_ffn_kernel(%arg0: i32, %arg1: memref<16x128xf32, #tpu.memory_space<vmem>>, %arg2: memref<1x128xf32, #tpu.memory_space<vmem>>, %arg3: memref<1x128xf32, #tpu.memory_space<vmem>>, %arg4: memref<128x128xf32, #tpu.memory_space<vmem>>, %arg5: memref<1x128xf32, #tpu.memory_space<vmem>>, %arg6: memref<128x128xf32, #tpu.memory_space<vmem>>, %arg7: memref<1x128xf32, #tpu.memory_space<vmem>>, %arg8: memref<16x128xf32, #tpu.memory_space<vmem>>) attributes {dimension_semantics = [#tpu.dimension_semantics<parallel>], iteration_bounds = array<i64: 1>, scalar_prefetch = 0 : i64, scratch_operands = 0 : i64, tpu.core_type = #tpu.core_type<tc>, window_params = [{transform_indices = @transform_0, window_bounds = array<i64: 16, 128>}, {pipeline_mode = #tpu.pipeline_mode<synchronous>, transform_indices = @transform_1, window_bounds = array<i64: 1, 128>}, {pipeline_mode = #tpu.pipeline_mode<synchronous>, transform_indices = @transform_2, window_bounds = array<i64: 1, 128>}, {pipeline_mode = #tpu.pipeline_mode<synchronous>, transform_indices = @transform_3, window_bounds = array<i64: 128, 128>}, {pipeline_mode = #tpu.pipeline_mode<synchronous>, transform_indices = @transform_4, window_bounds = array<i64: 1, 128>}, {pipeline_mode = #tpu.pipeline_mode<synchronous>, transform_indices = @transform_5, window_bounds = array<i64: 128, 128>}, {pipeline_mode = #tpu.pipeline_mode<synchronous>, transform_indices = @transform_6, window_bounds = array<i64: 1, 128>}, {transform_indices = @transform_7, window_bounds = array<i64: 16, 128>}]} {
    %c0 = arith.constant 0 : index
    %c0_0 = arith.constant 0 : index
    %0 = vector.load %arg1[%c0, %c0_0] : memref<16x128xf32, #tpu.memory_space<vmem>>, vector<16x128xf32>
    %cst = arith.constant dense<0.000000e+00> : vector<16xf32>
    %1 = vector.multi_reduction <add>, %0, %cst [1] : vector<16x128xf32> to vector<16xf32>
    %2 = vector.shape_cast %1 : vector<16xf32> to vector<16x1xf32>
    %cst_1 = arith.constant 3.125000e-02 : f32
    %3 = vector.broadcast %cst_1 : f32 to vector<16x1xf32>
    %4 = arith.mulf %2, %3 : vector<16x1xf32>
    %5 = arith.mulf %0, %0 : vector<16x128xf32>
    %cst_2 = arith.constant dense<0.000000e+00> : vector<16xf32>
    %6 = vector.multi_reduction <add>, %5, %cst_2 [1] : vector<16x128xf32> to vector<16xf32>
    %7 = vector.shape_cast %6 : vector<16xf32> to vector<16x1xf32>
    %cst_3 = arith.constant 3.125000e-02 : f32
    %8 = vector.broadcast %cst_3 : f32 to vector<16x1xf32>
    %9 = arith.mulf %7, %8 : vector<16x1xf32>
    %10 = arith.mulf %4, %4 : vector<16x1xf32>
    %11 = arith.subf %9, %10 : vector<16x1xf32>
    %cst_4 = arith.constant 9.99999974E-6 : f32
    %12 = vector.broadcast %cst_4 : f32 to vector<16x1xf32>
    %13 = arith.addf %11, %12 : vector<16x1xf32>
    %14 = math.rsqrt %13 : vector<16x1xf32>
    %15 = vector.broadcast %4 : vector<16x1xf32> to vector<16x128xf32>
    %16 = arith.subf %0, %15 : vector<16x128xf32>
    %17 = vector.broadcast %14 : vector<16x1xf32> to vector<16x128xf32>
    %18 = arith.mulf %16, %17 : vector<16x128xf32>
    %c0_5 = arith.constant 0 : index
    %c0_6 = arith.constant 0 : index
    %19 = vector.load %arg2[%c0_5, %c0_6] : memref<1x128xf32, #tpu.memory_space<vmem>>, vector<1x128xf32>
    %20 = vector.broadcast %19 : vector<1x128xf32> to vector<16x128xf32>
    %21 = arith.mulf %18, %20 : vector<16x128xf32>
    %c0_7 = arith.constant 0 : index
    %c0_8 = arith.constant 0 : index
    %22 = vector.load %arg3[%c0_7, %c0_8] : memref<1x128xf32, #tpu.memory_space<vmem>>, vector<1x128xf32>
    %23 = vector.broadcast %22 : vector<1x128xf32> to vector<16x128xf32>
    %24 = arith.addf %21, %23 : vector<16x128xf32>
    %c0_9 = arith.constant 0 : index
    %c0_10 = arith.constant 0 : index
    %25 = vector.load %arg4[%c0_9, %c0_10] : memref<128x128xf32, #tpu.memory_space<vmem>>, vector<128x128xf32>
    %cst_11 = arith.constant dense<0.000000e+00> : vector<16x128xf32>
    %26 = tpu.matmul %24, %25, %cst_11 {dimension_numbers = #tpu.dot_dimension_numbers<[1], [0], [0], [1], [0, 0, 1, 1], [], []>} : vector<16x128xf32>, vector<128x128xf32>, vector<16x128xf32> -> vector<16x128xf32>
    %c0_12 = arith.constant 0 : index
    %c0_13 = arith.constant 0 : index
    %27 = vector.load %arg5[%c0_12, %c0_13] : memref<1x128xf32, #tpu.memory_space<vmem>>, vector<1x128xf32>
    %28 = vector.broadcast %27 : vector<1x128xf32> to vector<16x128xf32>
    %29 = arith.addf %26, %28 : vector<16x128xf32>
    %cst_14 = arith.constant 5.000000e-01 : f32
    %30 = vector.broadcast %cst_14 : f32 to vector<16x128xf32>
    %31 = arith.mulf %30, %29 : vector<16x128xf32>
    %cst_15 = arith.constant 0.707106769 : f32
    %32 = vector.broadcast %cst_15 : f32 to vector<16x128xf32>
    %33 = arith.mulf %29, %32 : vector<16x128xf32>
    %34 = math.erf %33 : vector<16x128xf32>
    %cst_16 = arith.constant 1.000000e+00 : f32
    %35 = vector.broadcast %cst_16 : f32 to vector<16x128xf32>
    %36 = arith.addf %35, %34 : vector<16x128xf32>
    %37 = arith.mulf %31, %36 : vector<16x128xf32>
    %c0_17 = arith.constant 0 : index
    %c0_18 = arith.constant 0 : index
    %38 = vector.load %arg6[%c0_17, %c0_18] : memref<128x128xf32, #tpu.memory_space<vmem>>, vector<128x128xf32>
    %cst_19 = arith.constant dense<0.000000e+00> : vector<16x128xf32>
    %39 = tpu.matmul %37, %38, %cst_19 {dimension_numbers = #tpu.dot_dimension_numbers<[1], [0], [0], [1], [0, 0, 1, 1], [], []>} : vector<16x128xf32>, vector<128x128xf32>, vector<16x128xf32> -> vector<16x128xf32>
    %c0_20 = arith.constant 0 : index
    %c0_21 = arith.constant 0 : index
    %40 = vector.load %arg7[%c0_20, %c0_21] : memref<1x128xf32, #tpu.memory_space<vmem>>, vector<1x128xf32>
    %41 = vector.broadcast %40 : vector<1x128xf32> to vector<16x128xf32>
    %42 = arith.addf %39, %41 : vector<16x128xf32>
    %c0_22 = arith.constant 0 : index
    %c0_23 = arith.constant 0 : index
    %43 = vector.load %arg8[%c0_22, %c0_23] : memref<16x128xf32, #tpu.memory_space<vmem>>, vector<16x128xf32>
    tpu.vector_store %arg8[%c0_22, %c0_23], %42 {strides = array<i32>} : memref<16x128xf32, #tpu.memory_space<vmem>>, vector<16x128xf32>,
    return
  }
  func.func @transform_0(%arg0: i32) -> (i32, i32) {
    %c0_i32 = arith.constant 0 : i32
    %c0_i32_0 = arith.constant 0 : i32
    return %arg0, %c0_i32 : i32, i32
  }
  func.func @transform_1(%arg0: i32) -> (i32, i32) {
    %c0_i32 = arith.constant 0 : i32
    %c0_i32_0 = arith.constant 0 : i32
    %c0_i32_1 = arith.constant 0 : i32
    return %c0_i32, %c0_i32_0 : i32, i32
  }
  func.func @transform_2(%arg0: i32) -> (i32, i32) {
    %c0_i32 = arith.constant 0 : i32
    %c0_i32_0 = arith.constant 0 : i32
    %c0_i32_1 = arith.constant 0 : i32
    return %c0_i32, %c0_i32_0 : i32, i32
  }
  func.func @transform_3(%arg0: i32) -> (i32, i32) {
    %c0_i32 = arith.constant 0 : i32
    %c0_i32_0 = arith.constant 0 : i32
    %c0_i32_1 = arith.constant 0 : i32
    return %c0_i32, %c0_i32_0 : i32, i32
  }
  func.func @transform_4(%arg0: i32) -> (i32, i32) {
    %c0_i32 = arith.constant 0 : i32
    %c0_i32_0 = arith.constant 0 : i32
    %c0_i32_1 = arith.constant 0 : i32
    return %c0_i32, %c0_i32_0 : i32, i32
  }
  func.func @transform_5(%arg0: i32) -> (i32, i32) {
    %c0_i32 = arith.constant 0 : i32
    %c0_i32_0 = arith.constant 0 : i32
    %c0_i32_1 = arith.constant 0 : i32
    return %c0_i32, %c0_i32_0 : i32, i32
  }
  func.func @transform_6(%arg0: i32) -> (i32, i32) {
    %c0_i32 = arith.constant 0 : i32
    %c0_i32_0 = arith.constant 0 : i32
    %c0_i32_1 = arith.constant 0 : i32
    return %c0_i32, %c0_i32_0 : i32, i32
  }
  func.func @transform_7(%arg0: i32) -> (i32, i32) {
    %c0_i32 = arith.constant 0 : i32
    %c0_i32_0 = arith.constant 0 : i32
    return %arg0, %c0_i32 : i32, i32
  }
}

</mosaic_0001>

<llo_original>
// kernel: pre_norm_feed_forward.1
$region0: #{pre_norm_feed_forward.1}
  #allocation0 [shape = 'u32[]', space=smem, size = 0x4, offset = 0x4, fixed_abs, tag = 'smem constant byte address 0x4 - core index']
  #allocation1 [shape = 'u32[144,128]{1,0:T(1,128)}', space=vmem, size = 0x12000, scoped, tag = 'internal scratch']
  %s0 = inlined_call_operand.vmem [shape: f32[16,128], index: 0, kind: input, shape index: {}]
  %s1 = inlined_call_operand.vmem [shape: f32[1,128], index: 1, kind: input, shape index: {}]
  %s2 = inlined_call_operand.vmem [shape: f32[1,128], index: 2, kind: input, shape index: {}]
  %s3 = inlined_call_operand.vmem [shape: f32[128,128], index: 3, kind: input, shape index: {}]
  %s4 = inlined_call_operand.vmem [shape: f32[1,128], index: 4, kind: input, shape index: {}]
  %s5 = inlined_call_operand.vmem [shape: f32[128,128], index: 5, kind: input, shape index: {}]
  %s6 = inlined_call_operand.vmem [shape: f32[1,128], index: 6, kind: input, shape index: {}]
  %s7 = inlined_call_operand.vmem [shape: f32[16,128], index: 7, kind: output, shape index: {}]
  %s8 = sld [smem:[#allocation0]]
  $region38: #{pre_norm_feed_forward.1} parent=0
    _
  %s10 = ssub.s32 1, %s8
  %s11 = scalar_select 0, %s10, %s8
  // Predicated region
  $region2: #{pre_norm_feed_forward.1} parent=0 // pred_check
    _
  $region3: #{pre_norm_feed_forward.1} parent=0 // pred_check_branch
    %13 = sbr.rel (0) target = $region5
  $region4: #{pre_norm_feed_forward.1} parent=0 // pred_region
    _
  $region5: #{pre_norm_feed_forward.1} parent=0 // pred_fallthru
    _
  // Predicated region
  $region6: #{pre_norm_feed_forward.1} parent=0 // pred_check
    _
  $region7: #{pre_norm_feed_forward.1} parent=0 // pred_check_branch
    %15 = sbr.rel (0) target = $region9
  $region8: #{pre_norm_feed_forward.1} parent=0 // pred_region
    _
  $region9: #{pre_norm_feed_forward.1} parent=0 // pred_fallthru
    _
  // Predicated region
  $region10: #{pre_norm_feed_forward.1} parent=0 // pred_check
    _
  $region11: #{pre_norm_feed_forward.1} parent=0 // pred_check_branch
    %17 = sbr.rel (0) target = $region13
  $region12: #{pre_norm_feed_forward.1} parent=0 // pred_region
    _
  $region13: #{pre_norm_feed_forward.1} parent=0 // pred_fallthru
    _
  // Predicated region
  $region14: #{pre_norm_feed_forward.1} parent=0 // pred_check
    _
  $region15: #{pre_norm_feed_forward.1} parent=0 // pred_check_branch
    %19 = sbr.rel (0) target = $region17
  $region16: #{pre_norm_feed_forward.1} parent=0 // pred_region
    _
  $region17: #{pre_norm_feed_forward.1} parent=0 // pred_fallthru
    _
  // Predicated region
  $region18: #{pre_norm_feed_forward.1} parent=0 // pred_check
    _
  $region19: #{pre_norm_feed_forward.1} parent=0 // pred_check_branch
    %21 = sbr.rel (0) target = $region21
  $region20: #{pre_norm_feed_forward.1} parent=0 // pred_region
    _
  $region21: #{pre_norm_feed_forward.1} parent=0 // pred_fallthru
    _
  // Predicated region
  $region22: #{pre_norm_feed_forward.1} parent=0 // pred_check
    _
  $region23: #{pre_norm_feed_forward.1} parent=0 // pred_check_branch
    %23 = sbr.rel (0) target = $region25
  $region24: #{pre_norm_feed_forward.1} parent=0 // pred_region
    _
  $region25: #{pre_norm_feed_forward.1} parent=0 // pred_fallthru
    _
  // Predicated region
  $region26: #{pre_norm_feed_forward.1} parent=0 // pred_check
    _
  $region27: #{pre_norm_feed_forward.1} parent=0 // pred_check_branch
    %25 = sbr.rel (0) target = $region29
  $region28: #{pre_norm_feed_forward.1} parent=0 // pred_region
    _
  $region29: #{pre_norm_feed_forward.1} parent=0 // pred_fallthru
    _
  %v26 = vld [vmem:[%s0] sm:$0xff]
  %v27 = vld [vmem:[%s0 + $0x8] sm:$0xff]
  %28 = vadd.xlane.f32.xlu0 %v26
  %v29 = vpop.xlane.xlu0 %28
  %30 = vadd.xlane.f32.xlu0 %v27
  %v31 = vpop.xlane.xlu0 %30
  %v32 = vmul.f32 %v29, 0.03125
  %v33 = vmul.f32 %v31, 0.03125
  %v34 = vmul.f32 %v26, %v26
  %v35 = vmul.f32 %v27, %v27
  %36 = vadd.xlane.f32.xlu0 %v34
  %v37 = vpop.xlane.xlu0 %36
  %38 = vadd.xlane.f32.xlu0 %v35
  %v39 = vpop.xlane.xlu0 %38
  %v40 = vmul.f32 %v37, 0.03125
  %v41 = vmul.f32 %v39, 0.03125
  %v42 = vmul.f32 %v32, %v32
  %v43 = vmul.f32 %v33, %v33
  %v44 = vsub.f32 %v40, %v42
  %v45 = vsub.f32 %v41, %v43
  %v46 = vadd.f32 %v44, 1e-05
  %v47 = vadd.f32 %v45, 1e-05
  %v48 = vrsqrt.pop %v46
  %v49 = vrsqrt.pop %v47
  %v50 = vsub.f32 %v26, %v32
  %v51 = vsub.f32 %v27, %v33
  %v52 = vmul.f32 %v50, %v48
  %v53 = vmul.f32 %v51, %v49
  %v54 = vld [vmem:[%s1] sm:$0x1]
  %v56 = vlaneseq
  %v57 = vshrl.u32 %v56, 7
  %v58 = vsub.s32 0, %v57
  %v59 = vrot.slane %v54, %v58
  %v61 = vmul.f32 %v52, %v59
  %v62 = vmul.f32 %v53, %v59
  %v63 = vld [vmem:[%s2] sm:$0x1]
  %v65 = vlaneseq
  %v66 = vshrl.u32 %v65, 7
  %v67 = vsub.s32 0, %v66
  %v68 = vrot.slane %v63, %v67
  %v70 = vadd.f32 %v61, %v68
  %v71 = vadd.f32 %v62, %v68
  %v72 = vld [vmem:[%s3] sm:$0xff]
  %v73 = vld [vmem:[%s3 + $0x8] sm:$0xff]
  %v74 = vld [vmem:[%s3 + $0x10] sm:$0xff]
  %v75 = vld [vmem:[%s3 + $0x18] sm:$0xff]
  %v76 = vld [vmem:[%s3 + $0x20] sm:$0xff]
  %v77 = vld [vmem:[%s3 + $0x28] sm:$0xff]
  %v78 = vld [vmem:[%s3 + $0x30] sm:$0xff]
  %v79 = vld [vmem:[%s3 + $0x38] sm:$0xff]
  %v80 = vld [vmem:[%s3 + $0x40] sm:$0xff]
  %v81 = vld [vmem:[%s3 + $0x48] sm:$0xff]
  %v82 = vld [vmem:[%s3 + $0x50] sm:$0xff]
  %v83 = vld [vmem:[%s3 + $0x58] sm:$0xff]
  %v84 = vld [vmem:[%s3 + $0x60] sm:$0xff]
  %v85 = vld [vmem:[%s3 + $0x68] sm:$0xff]
  %v86 = vld [vmem:[%s3 + $0x70] sm:$0xff]
  %v87 = vld [vmem:[%s3 + $0x78] sm:$0xff]
  %v88 = vld [vmem:[%s4] sm:$0x1]
  %v90 = vlaneseq
  %v91 = vshrl.u32 %v90, 7
  %v92 = vsub.s32 0, %v91
  %v93 = vrot.slane %v88, %v92
  %95 = vmatprep.subr.mxu0 0.0
  %96 = vmatpush1.msra.mxu0 %v87
  %97 = vmatprep.subr.mxu0 0.0
  %98 = vmatpush1.msra.mxu0 %v86
  %99 = vmatprep.subr.mxu0 0.0
  %100 = vmatpush1.msra.mxu0 %v85
  %101 = vmatprep.subr.mxu0 0.0
  %102 = vmatpush1.msra.mxu0 %v84
  %103 = vmatprep.subr.mxu0 0.0
  %104 = vmatpush1.msra.mxu0 %v83
  %105 = vmatprep.subr.mxu0 0.0
  %106 = vmatpush1.msra.mxu0 %v82
  %107 = vmatprep.subr.mxu0 0.0
  %108 = vmatpush1.msra.mxu0 %v81
  %109 = vmatprep.subr.mxu0 0.0
  %110 = vmatpush1.msra.mxu0 %v80
  %111 = vmatprep.subr.mxu0 0.0
  %112 = vmatpush1.msra.mxu0 %v79
  %113 = vmatprep.subr.mxu0 0.0
  %114 = vmatpush1.msra.mxu0 %v78
  %115 = vmatprep.subr.mxu0 0.0
  %116 = vmatpush1.msra.mxu0 %v77
  %117 = vmatprep.subr.mxu0 0.0
  %118 = vmatpush1.msra.mxu0 %v76
  %119 = vmatprep.subr.mxu0 0.0
  %120 = vmatpush1.msra.mxu0 %v75
  %121 = vmatprep.subr.mxu0 0.0
  %122 = vmatpush1.msra.mxu0 %v74
  %123 = vmatprep.subr.mxu0 0.0
  %124 = vmatpush1.msra.mxu0 %v73
  %125 = vmatprep.subr.mxu0 0.0
  %126 = vmatpush1.msra.mxu0 %v72
  %127 = vmatprep.subr.mxu0 0.0
  %128 = vmatpush2.msra.mxu0 0.0
  %129 = vmatprep.subr.mxu0 0.0
  %130 = vmatpush2.msra.mxu0 0.0
  %131 = vmatprep.subr.mxu0 0.0
  %132 = vmatpush2.msra.mxu0 0.0
  %133 = vmatprep.subr.mxu0 0.0
  %134 = vmatpush2.msra.mxu0 0.0
  %135 = vmatprep.subr.mxu0 0.0
  %136 = vmatpush2.msra.mxu0 0.0
  %137 = vmatprep.subr.mxu0 0.0
  %138 = vmatpush2.msra.mxu0 0.0
  %139 = vmatprep.subr.mxu0 0.0
  %140 = vmatpush2.msra.mxu0 0.0
  %141 = vmatprep.subr.mxu0 0.0
  %142 = vmatpush2.msra.mxu0 0.0
  %143 = vmatprep.subr.mxu0 0.0
  %144 = vmatpush2.msra.mxu0 0.0
  %145 = vmatprep.subr.mxu0 0.0
  %146 = vmatpush2.msra.mxu0 0.0
  %147 = vmatprep.subr.mxu0 0.0
  %148 = vmatpush2.msra.mxu0 0.0
  %149 = vmatprep.subr.mxu0 0.0
  %150 = vmatpush2.msra.mxu0 0.0
  %151 = vmatprep.subr.mxu0 0.0
  %152 = vmatpush2.msra.mxu0 0.0
  %153 = vmatprep.subr.mxu0 0.0
  %154 = vmatpush2.msra.mxu0 0.0
  %155 = vmatprep.subr.mxu0 0.0
  %156 = vmatpush2.msra.mxu0 0.0
  %157 = vmatprep.subr.mxu0 0.0
  %158 = vmatpush2.msra.mxu0 0.0
  %159 = vmatprep.mubr.f32.mxu0 0.0
  %160 = vmatmul.mubr.f32.gmra.mxu0 %v70
  %v161 = vpop.f32.mrf.mxu0
  %v162 = vadd.f32 %v93, %v161
  %v163 = vpop.f32.mrf.mxu0
  %164 = vmatprep.mubr.f32.mxu0 0.0
  %165 = vmatmul.mubr.f32.gmra.mxu0 %v71
  %v166 = vpop.f32.mrf.mxu0
  %v167 = vadd.f32 %v93, %v166
  %v168 = vpop.f32.mrf.mxu0
  %169 = vdwg.mxu0
  %v170 = vmul.f32 %v162, 0.5
  %v171 = vmul.f32 %v167, 0.5
  %v172 = vmul.f32 %v162, 0.70710677
  %v173 = vmul.f32 %v167, 0.70710677
  %v174 = verf.f32.pop %v172
  %v175 = verf.f32.pop %v173
  %v176 = vadd.f32 %v174, 1.0
  %v177 = vadd.f32 %v175, 1.0
  %v178 = vmul.f32 %v170, %v176
  %v179 = vmul.f32 %v171, %v177
  %v180 = vld [vmem:[%s5] sm:$0xff]
  %v181 = vld [vmem:[%s5 + $0x8] sm:$0xff]
  %v182 = vld [vmem:[%s5 + $0x10] sm:$0xff]
  %v183 = vld [vmem:[%s5 + $0x18] sm:$0xff]
  %v184 = vld [vmem:[%s5 + $0x20] sm:$0xff]
  %v185 = vld [vmem:[%s5 + $0x28] sm:$0xff]
  %v186 = vld [vmem:[%s5 + $0x30] sm:$0xff]
  %v187 = vld [vmem:[%s5 + $0x38] sm:$0xff]
  %v188 = vld [vmem:[%s5 + $0x40] sm:$0xff]
  %v189 = vld [vmem:[%s5 + $0x48] sm:$0xff]
  %v190 = vld [vmem:[%s5 + $0x50] sm:$0xff]
  %v191 = vld [vmem:[%s5 + $0x58] sm:$0xff]
  %v192 = vld [vmem:[%s5 + $0x60] sm:$0xff]
  %v193 = vld [vmem:[%s5 + $0x68] sm:$0xff]
  %v194 = vld [vmem:[%s5 + $0x70] sm:$0xff]
  %v195 = vld [vmem:[%s5 + $0x78] sm:$0xff]
  %v196 = vld [vmem:[%s6] sm:$0x1]
  %v198 = vlaneseq
  %v199 = vshrl.u32 %v198, 7
  %v200 = vsub.s32 0, %v199
  %v201 = vrot.slane %v196, %v200
  %203 = vmatprep.subr.mxu0 0.0
  %204 = vmatpush1.msra.mxu0 %v195
  %205 = vmatprep.subr.mxu0 0.0
  %206 = vmatpush1.msra.mxu0 %v194
  %207 = vmatprep.subr.mxu0 0.0
  %208 = vmatpush1.msra.mxu0 %v193
  %209 = vmatprep.subr.mxu0 0.0
  %210 = vmatpush1.msra.mxu0 %v192
  %211 = vmatprep.subr.mxu0 0.0
  %212 = vmatpush1.msra.mxu0 %v191
  %213 = vmatprep.subr.mxu0 0.0
  %214 = vmatpush1.msra.mxu0 %v190
  %215 = vmatprep.subr.mxu0 0.0
  %216 = vmatpush1.msra.mxu0 %v189
  %217 = vmatprep.subr.mxu0 0.0
  %218 = vmatpush1.msra.mxu0 %v188
  %219 = vmatprep.subr.mxu0 0.0
  %220 = vmatpush1.msra.mxu0 %v187
  %221 = vmatprep.subr.mxu0 0.0
  %222 = vmatpush1.msra.mxu0 %v186
  %223 = vmatprep.subr.mxu0 0.0
  %224 = vmatpush1.msra.mxu0 %v185
  %225 = vmatprep.subr.mxu0 0.0
  %226 = vmatpush1.msra.mxu0 %v184
  %227 = vmatprep.subr.mxu0 0.0
  %228 = vmatpush1.msra.mxu0 %v183
  %229 = vmatprep.subr.mxu0 0.0
  %230 = vmatpush1.msra.mxu0 %v182
  %231 = vmatprep.subr.mxu0 0.0
  %232 = vmatpush1.msra.mxu0 %v181
  %233 = vmatprep.subr.mxu0 0.0
  %234 = vmatpush1.msra.mxu0 %v180
  %235 = vmatprep.subr.mxu0 0.0
  %236 = vmatpush2.msra.mxu0 0.0
  %237 = vmatprep.subr.mxu0 0.0
  %238 = vmatpush2.msra.mxu0 0.0
  %239 = vmatprep.subr.mxu0 0.0
  %240 = vmatpush2.msra.mxu0 0.0
  %241 = vmatprep.subr.mxu0 0.0
  %242 = vmatpush2.msra.mxu0 0.0
  %243 = vmatprep.subr.mxu0 0.0
  %244 = vmatpush2.msra.mxu0 0.0
  %245 = vmatprep.subr.mxu0 0.0
  %246 = vmatpush2.msra.mxu0 0.0
  %247 = vmatprep.subr.mxu0 0.0
  %248 = vmatpush2.msra.mxu0 0.0
  %249 = vmatprep.subr.mxu0 0.0
  %250 = vmatpush2.msra.mxu0 0.0
  %251 = vmatprep.subr.mxu0 0.0
  %252 = vmatpush2.msra.mxu0 0.0
  %253 = vmatprep.subr.mxu0 0.0
  %254 = vmatpush2.msra.mxu0 0.0
  %255 = vmatprep.subr.mxu0 0.0
  %256 = vmatpush2.msra.mxu0 0.0
  %257 = vmatprep.subr.mxu0 0.0
  %258 = vmatpush2.msra.mxu0 0.0
  %259 = vmatprep.subr.mxu0 0.0
  %260 = vmatpush2.msra.mxu0 0.0
  %261 = vmatprep.subr.mxu0 0.0
  %262 = vmatpush2.msra.mxu0 0.0
  %263 = vmatprep.subr.mxu0 0.0
  %264 = vmatpush2.msra.mxu0 0.0
  %265 = vmatprep.subr.mxu0 0.0
  %266 = vmatpush2.msra.mxu0 0.0
  %267 = vmatprep.mubr.f32.mxu0 0.0
  %268 = vmatmul.mubr.f32.gmra.mxu0 %v178
  %v269 = vpop.f32.mrf.mxu0
  %v270 = vadd.f32 %v201, %v269
  %v271 = vpop.f32.mrf.mxu0
  %272 = vmatprep.mubr.f32.mxu0 0.0
  %273 = vmatmul.mubr.f32.gmra.mxu0 %v179
  %v274 = vpop.f32.mrf.mxu0
  %v275 = vadd.f32 %v201, %v274
  %v276 = vpop.f32.mrf.mxu0
  %277 = vdwg.mxu0
  %278 = vst [vmem:[%s7] sm:$0xff] %v270
  %279 = vst [vmem:[%s7 + $0x8] sm:$0xff] %v275
  // Predicated region
  $region30: #{pre_norm_feed_forward.1} parent=0 // pred_check
    _
  $region31: #{pre_norm_feed_forward.1} parent=0 // pred_check_branch
    %281 = sbr.rel (0) target = $region33
  $region32: #{pre_norm_feed_forward.1} parent=0 // pred_region
    _
  $region33: #{pre_norm_feed_forward.1} parent=0 // pred_fallthru
    _
  // Predicated region
  $region34: #{pre_norm_feed_forward.1} parent=0 // pred_check
    _
  $region35: #{pre_norm_feed_forward.1} parent=0 // pred_check_branch
    %283 = sbr.rel (0) target = $region37
  $region36: #{pre_norm_feed_forward.1} parent=0 // pred_region
    _
  $region37: #{pre_norm_feed_forward.1} parent=0 // pred_fallthru
    _

</llo_original>
